<compile_context>
chip_gen: v7x
topology: tpu7x:2x2x1
jax: 0.10.0
libtpu: 0.0.40
codegen_flags: <defaults>
</compile_context>

<pallas_src>
import jax
import jax.numpy as jnp
import numpy as np
from jax.experimental import pallas as pl
from jax.experimental.pallas import tpu as pltpu


def _loss_kernel(x_ref, t_ref, w_ref, out_ref):
    j = pl.program_id(1)

    x = x_ref[0]                              # (C, TN) f32 logits for this voxel tile
    t = t_ref[0].astype(jnp.int32)            # (1, TN) labels (stored as int8 in HBM)
    w = w_ref[...]                            # (C, 1)  class weights
    C, TN = x.shape

    cls = jax.lax.broadcasted_iota(jnp.int32, (C, TN), 0)
    is_tgt = cls == t                         # (C, TN) bool one-hot mask (never cast to f32)

    # softmax bookkeeping over the class (sublane) axis -- no full softmax materialized
    m = jnp.max(x, axis=0, keepdims=True)     # (1, TN)
    e = jnp.exp(x - m)                        # (C, TN)   EUP
    s = jnp.sum(e, axis=0, keepdims=True)     # (1, TN)
    inv_s = pl.reciprocal(s, approx=True)     # EUP slot, nearly free
    log_s = jnp.log(s)                        # (1, TN)   EUP

    # logit / weight of the target class (select + sublane reduce)
    x_tgt = jnp.sum(jnp.where(is_tgt, x, 0.0), axis=0, keepdims=True)   # (1, TN)
    w_tgt = jnp.sum(jnp.where(is_tgt, w, 0.0), axis=0, keepdims=True)   # (1, TN)

    fg = (t >= 1).astype(jnp.float32)         # voxel has a foreground label
    nll = (m - x_tgt) + log_s                 # -log_softmax[target]
    p_tgt = jnp.exp(x_tgt - m) * inv_s        # softmax prob of the target class
    p0 = e[0:1, :] * inv_s                    # softmax prob of class 0

    # pack the 5 per-voxel partials into one (8, TN) update -> single unmasked accumulate
    update = jnp.concatenate(
        [p_tgt * fg,                          # row 0: dice intersection
         1.0 - p0,                            # row 1: sum of probs over classes >= 1
         fg,                                  # row 2: sum of one-hot over classes >= 1
         w_tgt * nll,                         # row 3: weighted-CE numerator
         w_tgt,                               # row 4: weighted-CE denominator
         jnp.zeros((3, TN), jnp.float32)],    # rows 5-7: padding to a full 8-sublane tile
        axis=0)

    @pl.when(j == 0)
    def _():
        out_ref[0] = update

    @pl.when(j != 0)
    def _():
        out_ref[0] += update


def dice_ce_loss(logits, target, weight, *, alpha=0.5, smooth=0.01, tn=8192):
    """Forward pass of the PyTorch `Loss` module (dice + weighted CE)."""
    B, C, H, W, S = logits.shape
    N = H * W * S
    assert N % 128 == 0, "flattened spatial size must be a multiple of 128 lanes"
    assert C < 128, "labels are stored as int8"

    x = logits.reshape(B, C, N).astype(jnp.float32)
    t = target.reshape(B, 1, N).astype(jnp.int8)      # int8 labels: ~4x less label HBM traffic
    w = weight.reshape(C, 1).astype(jnp.float32)

    # Pick the largest lane tile <= tn that divides N (multiple of 128).
    tn = min(int(tn), N)
    tn -= tn % 128
    while N % tn:
        tn -= 128
    nj = N // tn

    partials = pl.pallas_call(
        _loss_kernel,
        out_shape=jax.ShapeDtypeStruct((B, 8, tn), jnp.float32),
        grid_spec=pltpu.PrefetchScalarGridSpec(
            num_scalar_prefetch=0,
            grid=(B, nj),                               # batch parallel, voxel tiles arbitrary
            in_specs=[
                pl.BlockSpec((1, C, tn), lambda b, j: (b, 0, j)),
                pl.BlockSpec((1, 1, tn), lambda b, j: (b, 0, j)),
                pl.BlockSpec((C, 1), lambda b, j: (0, 0)),
            ],
            # Output block is the per-batch accumulator: constant over j (revisited),
            # distinct per b -> safe to shard the batch axis across TensorCores.
            out_specs=pl.BlockSpec((1, 8, tn), lambda b, j: (b, 0, 0)),
        ),
        compiler_params=pltpu.CompilerParams(
            dimension_semantics=("parallel", "arbitrary"),
            vmem_limit_bytes=32 * 1024 * 1024,          # explicit budget, fits v5e/v6e/v7x
        ),
    )(x, t, w)

    # Tiny epilogue in plain JAX: reduce the (B, 8, tn) partials and combine.
    sums = jnp.sum(partials, axis=(0, 2))               # (8,)
    inter, sum_p, sum_t, ce_sum, w_sum = sums[0], sums[1], sums[2], sums[3], sums[4]
    dice = 2.0 * inter / (sum_p + sum_t + smooth)
    ce = ce_sum / w_sum                                  # PyTorch weighted-mean CE
    return (1.0 - alpha) * ce + (1.0 - dice) * alpha


def ref_loss(logits, target, weight, alpha=0.5, smooth=0.01):
    """Pure-JAX reference reproducing the PyTorch forward."""
    B, C = logits.shape[0], logits.shape[1]
    p = jax.nn.softmax(logits, axis=1)
    oh = jax.nn.one_hot(target, C, axis=-1)                     # (B, H, W, S, C)
    p1 = p.reshape(B, C, -1)[:, 1:, :]
    t1 = jnp.moveaxis(oh, -1, 1).reshape(B, C, -1)[:, 1:, :]
    inter = jnp.sum(p1 * t1)
    union = jnp.sum(p1) + jnp.sum(t1) + smooth
    dice = 2.0 * inter / union
    logp = jax.nn.log_softmax(logits, axis=1)
    nll = -jnp.take_along_axis(logp, target[:, None], axis=1)[:, 0]
    wv = weight[target]
    ce = jnp.sum(wv * nll) / jnp.sum(wv)
    return (1 - alpha) * ce + (1 - dice) * alpha


if __name__ == "__main__":
    B, C, H, W, S = 2, 4, 8, 8, 8
    alpha = 0.5

    key = jax.random.PRNGKey(0)
    k1, k2 = jax.random.split(key)
    logits = jax.random.normal(k1, (B, C, H, W, S), dtype=jnp.float32)
    target = jax.random.randint(k2, (B, H, W, S), 0, C, dtype=jnp.int32)
    # Deterministic per-class CE weights (the module's `weight` argument).
    weight = jnp.array([0.5, 1.0, 1.5, 2.0], dtype=jnp.float32)

    out = jax.block_until_ready(dice_ce_loss(logits, target, weight, alpha=alpha))
    ref = jax.block_until_ready(ref_loss(logits, target, weight, alpha=alpha))

    # approx reciprocal (EUP) is used for 1/sum(exp); tolerance reflects that.
    np.testing.assert_allclose(np.asarray(out), np.asarray(ref), rtol=1e-3, atol=1e-3)

    print("KERNEL_OK")
</pallas_src>

<mosaic_0001>
module attributes {stable_mosaic.version = 11 : i64} {
  func.func @_loss_kernel(%arg0: i32, %arg1: i32, %arg2: memref<1x4x512xf32, #tpu.memory_space<vmem>>, %arg3: memref<1x1x512xi8, #tpu.memory_space<vmem>>, %arg4: memref<4x1xf32, #tpu.memory_space<vmem>>, %arg5: memref<1x8x512xf32, #tpu.memory_space<vmem>>) attributes {dimension_semantics = [#tpu.dimension_semantics<parallel>, #tpu.dimension_semantics<arbitrary>], iteration_bounds = array<i64: 2, 1>, scalar_prefetch = 0 : i64, scratch_operands = 0 : i64, tpu.core_type = #tpu.core_type<tc>, window_params = [{transform_indices = @transform_0, window_bounds = array<i64: 1, 4, 512>}, {transform_indices = @transform_1, window_bounds = array<i64: 1, 1, 512>}, {pipeline_mode = #tpu.pipeline_mode<synchronous>, transform_indices = @transform_2, window_bounds = array<i64: 4, 1>}, {transform_indices = @transform_3, window_bounds = array<i64: 1, 8, 512>}]} {
    %c0 = arith.constant 0 : index
    %c0_0 = arith.constant 0 : index
    %c0_1 = arith.constant 0 : index
    %0 = vector.load %arg2[%c0, %c0_0, %c0_1] : memref<1x4x512xf32, #tpu.memory_space<vmem>>, vector<1x4x512xf32>
    %1 = vector.shape_cast %0 : vector<1x4x512xf32> to vector<4x512xf32>
    %c0_2 = arith.constant 0 : index
    %c0_3 = arith.constant 0 : index
    %c0_4 = arith.constant 0 : index
    %2 = vector.load %arg3[%c0_2, %c0_3, %c0_4] : memref<1x1x512xi8, #tpu.memory_space<vmem>>, vector<1x1x512xi8>
    %3 = vector.shape_cast %2 : vector<1x1x512xi8> to vector<1x512xi8>
    %4 = arith.extsi %3 : vector<1x512xi8> to vector<1x512xi32>
    %c0_5 = arith.constant 0 : index
    %c0_6 = arith.constant 0 : index
    %5 = vector.load %arg4[%c0_5, %c0_6] : memref<4x1xf32, #tpu.memory_space<vmem>>, vector<4x1xf32>
    %6 = tpu.iota {dimensions = array<i32: 0>} : vector<4x512xi32>
    %7 = vector.broadcast %4 : vector<1x512xi32> to vector<4x512xi32>
    %8 = arith.cmpi eq, %6, %7 : vector<4x512xi32>
    %cst = arith.constant dense<0xFF800000> : vector<512xf32>
    %9 = vector.multi_reduction <maximumf>, %1, %cst [0] : vector<4x512xf32> to vector<512xf32>
    %10 = vector.shape_cast %9 : vector<512xf32> to vector<1x512xf32>
    %11 = vector.broadcast %10 : vector<1x512xf32> to vector<4x512xf32>
    %12 = arith.subf %1, %11 : vector<4x512xf32>
    %13 = math.exp %12 : vector<4x512xf32>
    %cst_7 = arith.constant dense<0.000000e+00> : vector<512xf32>
    %14 = vector.multi_reduction <add>, %13, %cst_7 [0] : vector<4x512xf32> to vector<512xf32>
    %15 = vector.shape_cast %14 : vector<512xf32> to vector<1x512xf32>
    %16 = tpu.reciprocal %15 {approx = true} : vector<1x512xf32> -> vector<1x512xf32>
    %17 = math.log %15 : vector<1x512xf32>
    %cst_8 = arith.constant 0.000000e+00 : f32
    %18 = vector.broadcast %cst_8 : f32 to vector<4x512xf32>
    %19 = arith.select %8, %1, %18 : vector<4x512xi1>, vector<4x512xf32>
    %cst_9 = arith.constant dense<0.000000e+00> : vector<512xf32>
    %20 = vector.multi_reduction <add>, %19, %cst_9 [0] : vector<4x512xf32> to vector<512xf32>
    %21 = vector.shape_cast %20 : vector<512xf32> to vector<1x512xf32>
    %cst_10 = arith.constant 0.000000e+00 : f32
    %22 = vector.shape_cast %5 : vector<4x1xf32> to vector<4x1xf32>
    %23 = vector.broadcast %22 : vector<4x1xf32> to vector<4x512xf32>
    %24 = vector.broadcast %cst_10 : f32 to vector<4x512xf32>
    %25 = arith.select %8, %23, %24 : vector<4x512xi1>, vector<4x512xf32>
    %cst_11 = arith.constant dense<0.000000e+00> : vector<512xf32>
    %26 = vector.multi_reduction <add>, %25, %cst_11 [0] : vector<4x512xf32> to vector<512xf32>
    %27 = vector.shape_cast %26 : vector<512xf32> to vector<1x512xf32>
    %c1_i32 = arith.constant 1 : i32
    %28 = vector.broadcast %c1_i32 : i32 to vector<1x512xi32>
    %29 = arith.cmpi sge, %4, %28 : vector<1x512xi32>
    %30 = arith.extui %29 : vector<1x512xi1> to vector<1x512xi32>
    %31 = arith.sitofp %30 : vector<1x512xi32> to vector<1x512xf32>
    %32 = arith.subf %10, %21 : vector<1x512xf32>
    %33 = arith.addf %32, %17 : vector<1x512xf32>
    %34 = arith.subf %21, %10 : vector<1x512xf32>
    %35 = math.exp %34 : vector<1x512xf32>
    %36 = arith.mulf %35, %16 : vector<1x512xf32>
    %37 = vector.extract_strided_slice %13 {offsets = [0, 0], sizes = [1, 512], strides = [1, 1]} : vector<4x512xf32> to vector<1x512xf32>
    %38 = arith.mulf %37, %16 : vector<1x512xf32>
    %39 = arith.mulf %36, %31 : vector<1x512xf32>
    %cst_12 = arith.constant 1.000000e+00 : f32
    %40 = vector.broadcast %cst_12 : f32 to vector<1x512xf32>
    %41 = arith.subf %40, %38 : vector<1x512xf32>
    %42 = arith.mulf %27, %33 : vector<1x512xf32>
    %cst_13 = arith.constant 0.000000e+00 : f32
    %43 = vector.broadcast %cst_13 : f32 to vector<3x512xf32>
    %44 = tpu.concatenate %39, %41, %31, %42, %27, %43 in 0 : vector<1x512xf32>, vector<1x512xf32>, vector<1x512xf32>, vector<1x512xf32>, vector<1x512xf32>, vector<3x512xf32> -> vector<8x512xf32>
    %c0_i32 = arith.constant 0 : i32
    %45 = arith.cmpi eq, %arg1, %c0_i32 : i32
    %46 = arith.extui %45 : i1 to i32
    %c0_i32_14 = arith.constant 0 : i32
    %47 = arith.cmpi ne, %46, %c0_i32_14 : i32
    scf.if %47 {
      %c0_17 = arith.constant 0 : index
      %c0_18 = arith.constant 0 : index
      %c0_19 = arith.constant 0 : index
      %51 = vector.load %arg5[%c0_17, %c0_18, %c0_19] : memref<1x8x512xf32, #tpu.memory_space<vmem>>, vector<1x8x512xf32>
      %52 = vector.shape_cast %51 : vector<1x8x512xf32> to vector<8x512xf32>
      %53 = vector.shape_cast %44 : vector<8x512xf32> to vector<1x8x512xf32>
      tpu.vector_store %arg5[%c0_17, %c0_18, %c0_19], %53 {strides = array<i32>} : memref<1x8x512xf32, #tpu.memory_space<vmem>>, vector<1x8x512xf32>,
    } else {
    }
    %c0_i32_15 = arith.constant 0 : i32
    %48 = arith.cmpi ne, %arg1, %c0_i32_15 : i32
    %49 = arith.extui %48 : i1 to i32
    %c0_i32_16 = arith.constant 0 : i32
    %50 = arith.cmpi ne, %49, %c0_i32_16 : i32
    scf.if %50 {
      %c0_17 = arith.constant 0 : index
      %c0_18 = arith.constant 0 : index
      %c0_19 = arith.constant 0 : index
      %51 = vector.load %arg5[%c0_17, %c0_18, %c0_19] : memref<1x8x512xf32, #tpu.memory_space<vmem>>, vector<1x8x512xf32>
      %52 = vector.shape_cast %51 : vector<1x8x512xf32> to vector<8x512xf32>
      %53 = arith.addf %52, %44 : vector<8x512xf32>
      %c0_20 = arith.constant 0 : index
      %c0_21 = arith.constant 0 : index
      %c0_22 = arith.constant 0 : index
      %54 = vector.load %arg5[%c0_20, %c0_21, %c0_22] : memref<1x8x512xf32, #tpu.memory_space<vmem>>, vector<1x8x512xf32>
      %55 = vector.shape_cast %54 : vector<1x8x512xf32> to vector<8x512xf32>
      %56 = vector.shape_cast %53 : vector<8x512xf32> to vector<1x8x512xf32>
      tpu.vector_store %arg5[%c0_20, %c0_21, %c0_22], %56 {strides = array<i32>} : memref<1x8x512xf32, #tpu.memory_space<vmem>>, vector<1x8x512xf32>,
    } else {
    }
    return
  }
  func.func @transform_0(%arg0: i32, %arg1: i32) -> (i32, i32, i32) {
    %c0_i32 = arith.constant 0 : i32
    %c0_i32_0 = arith.constant 0 : i32
    return %arg0, %c0_i32, %arg1 : i32, i32, i32
  }
  func.func @transform_1(%arg0: i32, %arg1: i32) -> (i32, i32, i32) {
    %c0_i32 = arith.constant 0 : i32
    %c0_i32_0 = arith.constant 0 : i32
    return %arg0, %c0_i32, %arg1 : i32, i32, i32
  }
  func.func @transform_2(%arg0: i32, %arg1: i32) -> (i32, i32) {
    %c0_i32 = arith.constant 0 : i32
    %c0_i32_0 = arith.constant 0 : i32
    %c0_i32_1 = arith.constant 0 : i32
    return %c0_i32, %c0_i32_0 : i32, i32
  }
  func.func @transform_3(%arg0: i32, %arg1: i32) -> (i32, i32, i32) {
    %c0_i32 = arith.constant 0 : i32
    %c0_i32_0 = arith.constant 0 : i32
    %c0_i32_1 = arith.constant 0 : i32
    return %arg0, %c0_i32, %c0_i32_0 : i32, i32, i32
  }
}

</mosaic_0001>

<llo_original>
// kernel: tpu_custom_call.1
$region0: #{tpu_custom_call.1}
  #allocation0 [shape = 'u32[]', space=smem, size = 0x4, offset = 0x4, fixed_abs, tag = 'smem constant byte address 0x4 - core index']
  #allocation1 [shape = 'u32[144,128]{1,0:T(1,128)}', space=vmem, size = 0x12000, scoped, tag = 'internal scratch']
  %s0 = inlined_call_operand.hbm [shape: f32[2,4,512], index: 0, kind: input, shape index: {}]
  %s1 = inlined_call_operand.vmem [shape: s8[2,1,512], index: 1, kind: input, shape index: {}]
  %s2 = inlined_call_operand.vmem [shape: f32[4,1], index: 2, kind: input, shape index: {}]
  %s3 = inlined_call_operand.hbm [shape: f32[2,8,512], index: 3, kind: output, shape index: {}]
  %s4 = sld [smem:[#allocation0]]
  $region57: #{tpu_custom_call.1} parent=0
    _
  %s6 = ssub.s32 1, %s4
  %s7 = scalar_select 0, %s6, %s4
  $region1: #{tpu_custom_call.1} parent=0
    #allocation2 [shape = 'u8[16384]{0}', space=vmem, size = 0x4000, scoped, tag = 'input window, operand 0']
    #allocation3 [shape = 's32[2]{0}', space=sflag, size = 0x8, scoped, tag = 'scoped memory for tpu_custom_call.1']
    #allocation4 [shape = 's32[2]{0}', space=sflag, size = 0x8, scoped, tag = 'scoped memory for tpu_custom_call.1']
    #allocation5 [shape = 'u8[32768]{0}', space=vmem, size = 0x8000, scoped, tag = 'output window, operand 0']
    %8 = vsyncpa [#allocation3], 0
    %s9 = scalar_lea.sflag [#allocation3], 1
    %10 = vsyncpa %s9, 0
    %11 = vsyncpa [#allocation4], 0
    %s12 = scalar_lea.sflag [#allocation4], 1
    %13 = vsyncpa %s12, 0
    loop: start=0, step=1, limit=4
    $region2: #{tpu_custom_call.1} parent=1 // loop_pre_header
      _
    $region3: #{tpu_custom_call.1} parent=1 // loop_header
      %s15 = sphi 0, %s19
      %p16 = scmp.ge.s32.totalorder %s15, 4
      %s22 = sphi 0, %s34
      %s23 = sphi 0, %s30
      %s24 = sphi 0, %s22
      %s25 = sphi 0, %s23
      %s26 = sphi 0, %s24
      %s27 = sphi 0, %s25
      %s39 = sphi 0, %s41
      %s42 = sphi 0, %s39
      %s43 = sphi 0, %s42
      %s59 = sphi 0, %s43
      %s67 = sphi 0, %s69
      %s70 = sphi 0, %s67
      %s71 = sphi 0, %s70
      %s87 = sphi 0, %s71
      %s91 = sphi 0, %s91
      %s93 = sphi 0, %s91
      %s94 = sphi 0, %s93
      %s108 = sphi 0, %s94
      %s114 = sphi 0, %s116
      %s117 = sphi 0, %s114
      %s118 = sphi 0, %s117
      %s134 = sphi 0, %s118
    $region4: #{tpu_custom_call.1} parent=1 // loop_header_branch
      %18 = sbr.rel (%p16) target = $region8
    $region5: #{tpu_custom_call.1} parent=1 // loop_body
      %s20 = ssub.s32 %s15, 1
      %s21 = ssub.s32 %s15, 2
      %s28 = sadd.s32 1, %s23
      %p29 = scmp.ge.s32.totalorder %s28, 1
      %s30 = scalar_select %p29, 0, %s28
      %s31 = sadd.s32 1, %s22
      %s32 = scalar_select %p29, %s31, %s22
      %p33 = scmp.ge.s32.totalorder %s32, 2
      %s34 = scalar_select %p33, 0, %s32
      %s35 = ssub.s32 %s22, %s34
      %s36 = ssub.s32 %s23, %s30
      %s37 = sor.u32 %s35, %s36
      %p38 = scmp.eq.s32.totalorder %s37, 0
      %s40 = sadd.s32 %s39, 1
      %s41 = scalar_select %p38, %s39, %s40
      %p44 = pneg %p38
      %p45 = scmp.eq.s32.totalorder %s15, 1
      %p46 = por %p44, %p45
      %p47 = scmp.ne.s32.totalorder %s39, %s42
      %p48 = scmp.eq.s32.totalorder %s15, 0
      %p49 = por %p47, %p48
      %p50 = scmp.ne.s32.totalorder %s39, %s42
      %p51 = scmp.eq.s32.totalorder %s20, 1
      %p52 = por %p50, %p51
      %p53 = scmp.ne.s32.totalorder %s42, %s43
      %p54 = scmp.eq.s32.totalorder %s20, 0
      %p55 = por %p53, %p54
      %p56 = scmp.ne.s32.totalorder %s42, %s43
      %p57 = scmp.eq.s32.totalorder %s21, 1
      %p58 = por %p56, %p57
      %p60 = scmp.ne.s32.totalorder %s43, %s59
      %p61 = scmp.eq.s32.totalorder %s21, 0
      %p62 = por %p60, %p61
      %s63 = ssub.s32 %s22, %s34
      %s64 = ssub.s32 %s23, %s30
      %s65 = sor.u32 %s63, %s64
      %p66 = scmp.eq.s32.totalorder %s65, 0
      %s68 = sadd.s32 %s67, 1
      %s69 = scalar_select %p66, %s67, %s68
      %p72 = pneg %p66
      %p73 = scmp.eq.s32.totalorder %s15, 1
      %p74 = por %p72, %p73
      %p75 = scmp.ne.s32.totalorder %s67, %s70
      %p76 = scmp.eq.s32.totalorder %s15, 0
      %p77 = por %p75, %p76
      %p78 = scmp.ne.s32.totalorder %s67, %s70
      %p79 = scmp.eq.s32.totalorder %s20, 1
      %p80 = por %p78, %p79
      %p81 = scmp.ne.s32.totalorder %s70, %s71
      %p82 = scmp.eq.s32.totalorder %s20, 0
      %p83 = por %p81, %p82
      %p84 = scmp.ne.s32.totalorder %s70, %s71
      %p85 = scmp.eq.s32.totalorder %s21, 1
      %p86 = por %p84, %p85
      %p88 = scmp.ne.s32.totalorder %s71, %s87
      %p89 = scmp.eq.s32.totalorder %s21, 0
      %p90 = por %p88, %p89
      %s92 = sadd.s32 %s91, 1
      %p95 = scmp.eq.s32.totalorder %s15, 1
      %p96 = scmp.ne.s32.totalorder %s91, %s93
      %p97 = scmp.eq.s32.totalorder %s15, 0
      %p98 = por %p96, %p97
      %p99 = scmp.ne.s32.totalorder %s91, %s93
      %p100 = scmp.eq.s32.totalorder %s20, 1
      %p101 = por %p99, %p100
      %p102 = scmp.ne.s32.totalorder %s93, %s94
      %p103 = scmp.eq.s32.totalorder %s20, 0
      %p104 = por %p102, %p103
      %p105 = scmp.ne.s32.totalorder %s93, %s94
      %p106 = scmp.eq.s32.totalorder %s21, 1
      %p107 = por %p105, %p106
      %p109 = scmp.ne.s32.totalorder %s94, %s108
      %p110 = scmp.eq.s32.totalorder %s21, 0
      %p111 = por %p109, %p110
      %s112 = ssub.s32 %s22, %s34
      %p113 = scmp.eq.s32.totalorder %s112, 0
      %s115 = sadd.s32 %s114, 1
      %s116 = scalar_select %p113, %s114, %s115
      %p119 = pneg %p113
      %p120 = scmp.eq.s32.totalorder %s15, 1
      %p121 = por %p119, %p120
      %p122 = scmp.ne.s32.totalorder %s114, %s117
      %p123 = scmp.eq.s32.totalorder %s15, 0
      %p124 = por %p122, %p123
      %p125 = scmp.ne.s32.totalorder %s114, %s117
      %p126 = scmp.eq.s32.totalorder %s20, 1
      %p127 = por %p125, %p126
      %p128 = scmp.ne.s32.totalorder %s117, %s118
      %p129 = scmp.eq.s32.totalorder %s20, 0
      %p130 = por %p128, %p129
      %p131 = scmp.ne.s32.totalorder %s117, %s118
      %p132 = scmp.eq.s32.totalorder %s21, 1
      %p133 = por %p131, %p132
      %p135 = scmp.ne.s32.totalorder %s118, %s134
      %p136 = scmp.eq.s32.totalorder %s21, 0
      %p137 = por %p135, %p136
      %p138 = scmp.le.s32.totalorder 1, %s15
      %p139 = scmp.lt.s32.totalorder %s15, 3
      %p140 = pnand %p138, %p139
      %p141 = pneg %p140
      // Predicated region
      $region9: #{tpu_custom_call.1} parent=5 // pred_check
        _
      $region10: #{tpu_custom_call.1} parent=5 // pred_check_branch
        %143 = sbr.rel (%p140) target = $region12
      $region11: #{tpu_custom_call.1} parent=5 // pred_region
        %s144 = ssub.s32 %s15, 1
        // Predicated region
        $region13: #{tpu_custom_call.1} parent=11 // pred_check
          %p145 = pneg %p104
        $region14: #{tpu_custom_call.1} parent=11 // pred_check_branch
          %147 = sbr.rel (%p145) target = $region16
        $region15: #{tpu_custom_call.1} parent=11 // pred_region
          _
        $region16: #{tpu_custom_call.1} parent=11 // pred_fallthru
          _
      $region12: #{tpu_custom_call.1} parent=5 // pred_fallthru
        _
      %p148 = scmp.lt.s32.totalorder %s15, 2
      // Predicated region
      $region17: #{tpu_custom_call.1} parent=5 // pred_check
        %p149 = pneg %p148
      $region18: #{tpu_custom_call.1} parent=5 // pred_check_branch
        %151 = sbr.rel (%p149) target = $region20
      $region19: #{tpu_custom_call.1} parent=5 // pred_region
        // Predicated region
        $region21: #{tpu_custom_call.1} parent=19 // pred_check
          %p152 = pneg %p49
        $region22: #{tpu_custom_call.1} parent=19 // pred_check_branch
          %154 = sbr.rel (%p152) target = $region24
        $region23: #{tpu_custom_call.1} parent=19 // pred_region
          %s155 = sand.u32 %s39, 1
          %s156 = scalar_lea.sflag [#allocation3], %s155
          %s157 = sand.u32 %s39, 1
          %s158 = smul.addr %s157, 16
          %s159 = scalar_lea.vmem [#allocation2], %s158
          %s160 = smul.u32 4, %s23
          %s162 = ssub.s32 256, 256
          %163 = vsyncadd %s156, %s162
          %s164 = smul.addr %s22, 4
          %s165 = sadd.s32 %s160, %s164
          %s166 = smul.addr %s165, 64
          %s167 = scalar_lea.hbm %s0, %s166
          %s169 = sshll.u32 %s159, 4
          %s170 = int_to_ptr.vmem [resolvable:$true] %s169
          %172 = dma.hbm_to_vmem [thread:$0]  %s167, 256, %s170, %s156
        $region24: #{tpu_custom_call.1} parent=19 // pred_fallthru
          _
        // Predicated region
        $region25: #{tpu_custom_call.1} parent=19 // pred_check
          %p173 = pneg %p77
        $region26: #{tpu_custom_call.1} parent=19 // pred_check_branch
          %175 = sbr.rel (%p173) target = $region28
        $region27: #{tpu_custom_call.1} parent=19 // pred_region
          %s176 = smul.u32 4, %s23
          %p177 = scmp.lt.s32.totalorder %s22, 1
          %s178 = scalar_select %p177, %s22, 1
          %p179 = scmp.lt.s32.totalorder %s176, 3
          %s180 = scalar_select %p179, %s176, 3
          %s181 = smul.addr %s178, 4
          %s182 = sadd.s32 %s180, %s181
          %s183 = scalar_lea.vmem %s1, %s182
          %s184 = smul.u32 4, %s23
        $region28: #{tpu_custom_call.1} parent=19 // pred_fallthru
          _
      $region20: #{tpu_custom_call.1} parent=5 // pred_fallthru
        _
      %p185 = scmp.le.s32.totalorder 1, %s15
      %p186 = scmp.lt.s32.totalorder %s15, 3
      %p187 = pnand %p185, %p186
      %p188 = pneg %p187
      // Predicated region
      $region29: #{tpu_custom_call.1} parent=5 // pred_check
        _
      $region30: #{tpu_custom_call.1} parent=5 // pred_check_branch
        %190 = sbr.rel (%p187) target = $region32
      $region31: #{tpu_custom_call.1} parent=5 // pred_region
        %s191 = ssub.s32 %s15, 1
        %s192 = sand.u32 %s42, 1
        %s193 = scalar_lea.sflag [#allocation3], %s192
        %s194 = sand.u32 %s42, 1
        %s195 = smul.addr %s194, 16
        %s196 = scalar_lea.vmem [#allocation2], %s195
        // Predicated region
        $region33: #{tpu_custom_call.1} parent=31 // pred_check
          %p197 = pneg %p55
        $region34: #{tpu_custom_call.1} parent=31 // pred_check_branch
          %199 = sbr.rel (%p197) target = $region36
        $region35: #{tpu_custom_call.1} parent=31 // pred_region
          %200 = dma.done %s193, 256
        $region36: #{tpu_custom_call.1} parent=31 // pred_fallthru
          _
        %s201 = sand.u32 %s42, 1
        %s202 = scalar_lea.sflag [#allocation3], %s201
        %s203 = sand.u32 %s42, 1
        %s204 = smul.addr %s203, 16
        %s205 = scalar_lea.vmem [#allocation2], %s204
        %p206 = pneg %p55
        %p207 = pneg %p52
        %s208 = smul.u32 4, %s25
        %p209 = scmp.lt.s32.totalorder %s24, 1
        %s210 = scalar_select %p209, %s24, 1
        %p211 = scmp.lt.s32.totalorder %s208, 3
        %s212 = scalar_select %p211, %s208, 3
        %s213 = smul.addr %s210, 4
        %s214 = sadd.s32 %s212, %s213
        %s215 = scalar_lea.vmem %s1, %s214
        %p216 = pneg %p83
        %p217 = pneg %p80
        %p218 = pneg %p104
        %p219 = pneg %p101
        %p220 = pneg %p130
        %p221 = pneg %p127
        %s222 = sand.u32 %s117, 1
        %s223 = scalar_lea.sflag [#allocation4], %s222
        %s224 = sand.u32 %s117, 1
        %s225 = smul.addr %s224, 32
        %s226 = scalar_lea.vmem [#allocation5], %s225
        %s227 = smul.u32 4, %s25
        %s228 = smul.u32 4, %s25
        %p229 = scmp.lt.s32.totalorder %s24, 1
        %s230 = scalar_select %p229, %s24, 1
        %p231 = scmp.lt.s32.totalorder %s228, 3
        %s232 = scalar_select %p231, %s228, 3
        %s233 = smul.addr %s230, 4
        %s234 = sadd.s32 %s232, %s233
        %s235 = scalar_lea.vmem %s1, %s234
        %s236 = smul.u32 4, %s25
        %v237 = vld [vmem:[%s196] sm:$0xff]
        %v238 = vld [vmem:[%s196 + $0x8] sm:$0xff]
        %v239 = vld [vmem:[%s235] sm:$0xf]
        %v240 = vunpack.c.0.s8 %v239
        %v241 = vunpack.c.1.s8 %v239
        %v242 = vld [vmem:[%s2] sm:$0xf]
        %v243 = vlaneseq
        %v244 = vshrl.u32 %v243, 7
        %v245 = vlaneseq
        %v246 = vshrl.u32 %v245, 7
        %v247 = vsub.s32 0, %v246
        %v248 = vrot.slane %v240, %v247
        %v249 = vlaneseq
        %v250 = vshrl.u32 %v249, 7
        %v251 = vsub.s32 4, %v250
        %v252 = vrot.slane %v240, %v251
        %v253 = vlaneseq
        %v254 = vshrl.u32 %v253, 7
        %v255 = vsub.s32 0, %v254
        %v256 = vrot.slane %v241, %v255
        %v257 = vlaneseq
        %v258 = vshrl.u32 %v257, 7
        %v259 = vsub.s32 4, %v258
        %v260 = vrot.slane %v241, %v259
        %v261 = vlaneseq
        %v262 = vshrl.u32 %v261, 7
        %v263 = vsub.s32 0, %v262
        %v264 = vrot.slane %v248, %v263
        %v265 = vlaneseq
        %v266 = vshrl.u32 %v265, 7
        %v267 = vsub.s32 0, %v266
        %v268 = vrot.slane %v252, %v267
        %v269 = vlaneseq
        %v270 = vshrl.u32 %v269, 7
        %v271 = vsub.s32 0, %v270
        %v272 = vrot.slane %v256, %v271
        %v273 = vlaneseq
        %v274 = vshrl.u32 %v273, 7
        %v275 = vsub.s32 0, %v274
        %v276 = vrot.slane %v260, %v275
        %vm277 = vcmp.eq.s32.totalorder %v244, %v264
        %vm278 = vcmp.eq.s32.totalorder %v244, %v268
        %vm279 = vcmp.eq.s32.totalorder %v244, %v272
        %vm280 = vcmp.eq.s32.totalorder %v244, %v276
        %v283 = vcombine.high %v237, %v237
        %v284 = vcombine.high %v238, %v238
        %vm287 = vcmask 1043456
        %v288 = vsel %vm287, %v237, -inf
        %v289 = vrot.slane %v288, 4
        %v290 = vmax.f32 %v288, %v289
        %v291 = vrot.slane %v290, 2
        %v292 = vmax.f32 %v290, %v291
        %v293 = vrot.slane %v292, 1
        %v294 = vmax.f32 %v292, %v293
        %v295 = vsel %vm287, %v283, -inf
        %v296 = vrot.slane %v295, 4
        %v297 = vmax.f32 %v295, %v296
        %v298 = vrot.slane %v297, 2
        %v299 = vmax.f32 %v297, %v298
        %v300 = vrot.slane %v299, 1
        %v301 = vmax.f32 %v299, %v300
        %v302 = vsel %vm287, %v238, -inf
        %v303 = vrot.slane %v302, 4
        %v304 = vmax.f32 %v302, %v303
        %v305 = vrot.slane %v304, 2
        %v306 = vmax.f32 %v304, %v305
        %v307 = vrot.slane %v306, 1
        %v308 = vmax.f32 %v306, %v307
        %v309 = vsel %vm287, %v284, -inf
        %v310 = vrot.slane %v309, 4
        %v311 = vmax.f32 %v309, %v310
        %v312 = vrot.slane %v311, 2
        %v313 = vmax.f32 %v311, %v312
        %v314 = vrot.slane %v313, 1
        %v315 = vmax.f32 %v313, %v314
        %v320 = vcombine.low %v294, %v301
        %v321 = vcombine.low %v308, %v315
        %v324 = vsub.f32 %v237, %v320
        %v325 = vsub.f32 %v238, %v321
        %v326 = vmul.f32 %v324, 1.442695
        %v327 = vpow.pop %v326
        %v328 = vmul.f32 %v325, 1.442695
        %v329 = vpow.pop %v328
        %v332 = vcombine.high %v327, %v327
        %v333 = vcombine.high %v329, %v329
        %v336 = vsel %vm287, %v327, 0.0
        %v337 = vrot.slane %v336, 4
        %v338 = vadd.f32 %v336, %v337
        %v339 = vrot.slane %v338, 2
        %v340 = vadd.f32 %v338, %v339
        %v341 = vrot.slane %v340, 1
        %v342 = vadd.f32 %v340, %v341
        %v343 = vsel %vm287, %v332, 0.0
        %v344 = vrot.slane %v343, 4
        %v345 = vadd.f32 %v343, %v344
        %v346 = vrot.slane %v345, 2
        %v347 = vadd.f32 %v345, %v346
        %v348 = vrot.slane %v347, 1
        %v349 = vadd.f32 %v347, %v348
        %v350 = vsel %vm287, %v329, 0.0
        %v351 = vrot.slane %v350, 4
        %v352 = vadd.f32 %v350, %v351
        %v353 = vrot.slane %v352, 2
        %v354 = vadd.f32 %v352, %v353
        %v355 = vrot.slane %v354, 1
        %v356 = vadd.f32 %v354, %v355
        %v357 = vsel %vm287, %v333, 0.0
        %v358 = vrot.slane %v357, 4
        %v359 = vadd.f32 %v357, %v358
        %v360 = vrot.slane %v359, 2
        %v361 = vadd.f32 %v359, %v360
        %v362 = vrot.slane %v361, 1
        %v363 = vadd.f32 %v361, %v362
        %v364 = vrcp.pop %v342
        %v365 = vrcp.pop %v349
        %v366 = vrcp.pop %v356
        %v367 = vrcp.pop %v363
        %v368 = vlog2.pop %v342
        %v369 = vmul.f32 %v368, 0.6931472
        %v370 = vlog2.pop %v349
        %v371 = vmul.f32 %v370, 0.6931472
        %v372 = vlog2.pop %v356
        %v373 = vmul.f32 %v372, 0.6931472
        %v374 = vlog2.pop %v363
        %v375 = vmul.f32 %v374, 0.6931472
        %v376 = vsel %vm277, %v237, 0.0
        %v377 = vsel %vm278, %v283, 0.0
        %v378 = vsel %vm279, %v238, 0.0
        %v379 = vsel %vm280, %v284, 0.0
        %v380 = vsel %vm287, %v376, 0.0
        %v381 = vrot.slane %v380, 4
        %v382 = vadd.f32 %v380, %v381
        %v383 = vrot.slane %v382, 2
        %v384 = vadd.f32 %v382, %v383
        %v385 = vrot.slane %v384, 1
        %v386 = vadd.f32 %v384, %v385
        %v387 = vsel %vm287, %v377, 0.0
        %v388 = vrot.slane %v387, 4
        %v389 = vadd.f32 %v387, %v388
        %v390 = vrot.slane %v389, 2
        %v391 = vadd.f32 %v389, %v390
        %v392 = vrot.slane %v391, 1
        %v393 = vadd.f32 %v391, %v392
        %v394 = vsel %vm287, %v378, 0.0
        %v395 = vrot.slane %v394, 4
        %v396 = vadd.f32 %v394, %v395
        %v397 = vrot.slane %v396, 2
        %v398 = vadd.f32 %v396, %v397
        %v399 = vrot.slane %v398, 1
        %v400 = vadd.f32 %v398, %v399
        %v401 = vsel %vm287, %v379, 0.0
        %v402 = vrot.slane %v401, 4
        %v403 = vadd.f32 %v401, %v402
        %v404 = vrot.slane %v403, 2
        %v405 = vadd.f32 %v403, %v404
        %v406 = vrot.slane %v405, 1
        %v407 = vadd.f32 %v405, %v406
        %409 = vset.pattern.permute.xlu0 0
        %410 = vperm.xlu0 %409, %v242
        %v411 = vpop.permute.xlu0 %410
        %v413 = vsel %vm277, %v411, 0.0
        %v414 = vsel %vm278, %v411, 0.0
        %v415 = vsel %vm279, %v411, 0.0
        %v416 = vsel %vm280, %v411, 0.0
        %v417 = vsel %vm287, %v413, 0.0
        %v418 = vrot.slane %v417, 4
        %v419 = vadd.f32 %v417, %v418
        %v420 = vrot.slane %v419, 2
        %v421 = vadd.f32 %v419, %v420
        %v422 = vrot.slane %v421, 1
        %v423 = vadd.f32 %v421, %v422
        %v424 = vsel %vm287, %v414, 0.0
        %v425 = vrot.slane %v424, 4
        %v426 = vadd.f32 %v424, %v425
        %v427 = vrot.slane %v426, 2
        %v428 = vadd.f32 %v426, %v427
        %v429 = vrot.slane %v428, 1
        %v430 = vadd.f32 %v428, %v429
        %v431 = vsel %vm287, %v415, 0.0
        %v432 = vrot.slane %v431, 4
        %v433 = vadd.f32 %v431, %v432
        %v434 = vrot.slane %v433, 2
        %v435 = vadd.f32 %v433, %v434
        %v436 = vrot.slane %v435, 1
        %v437 = vadd.f32 %v435, %v436
        %v438 = vsel %vm287, %v416, 0.0
        %v439 = vrot.slane %v438, 4
        %v440 = vadd.f32 %v438, %v439
        %v441 = vrot.slane %v440, 2
        %v442 = vadd.f32 %v440, %v441
        %v443 = vrot.slane %v442, 1
        %v444 = vadd.f32 %v442, %v443
        %vm445 = vcmp.ge.s32.totalorder %v240, 1
        %vm446 = vcmp.ge.s32.totalorder %v241, 1
        %v447 = vsel %vm445, 1, 0
        %v448 = vsel %vm446, 1, 0
        %v449 = vcvt.s32.f32 %v447
        %v450 = vcvt.s32.f32 %v448
        %v451 = vsub.f32 %v294, %v386
        %v452 = vsub.f32 %v301, %v393
        %v453 = vsub.f32 %v308, %v400
        %v454 = vsub.f32 %v315, %v407
        %v455 = vadd.f32 %v451, %v369
        %v456 = vadd.f32 %v452, %v371
        %v457 = vadd.f32 %v453, %v373
        %v458 = vadd.f32 %v454, %v375
        %v459 = vsub.f32 %v386, %v294
        %v460 = vsub.f32 %v393, %v301
        %v461 = vsub.f32 %v400, %v308
        %v462 = vsub.f32 %v407, %v315
        %v463 = vmul.f32 %v459, 1.442695
        %v464 = vpow.pop %v463
        %v465 = vmul.f32 %v460, 1.442695
        %v466 = vpow.pop %v465
        %v467 = vmul.f32 %v461, 1.442695
        %v468 = vpow.pop %v467
        %v469 = vmul.f32 %v462, 1.442695
        %v470 = vpow.pop %v469
        %v471 = vmul.f32 %v464, %v364
        %v472 = vmul.f32 %v466, %v365
        %v473 = vmul.f32 %v468, %v366
        %v474 = vmul.f32 %v470, %v367
        %v479 = vcombine.low %v364, %v365
        %v480 = vcombine.low %v366, %v367
        %v483 = vmul.f32 %v327, %v479
        %v484 = vmul.f32 %v329, %v480
        %v487 = vlaneseq
        %v488 = vshrl.u32 %v487, 7
        %v489 = vsub.s32 0, %v488
        %v490 = vrot.slane %v449, %v489
        %v491 = vlaneseq
        %v492 = vshrl.u32 %v491, 7
        %v493 = vsub.s32 4, %v492
        %v494 = vrot.slane %v449, %v493
        %v495 = vlaneseq
        %v496 = vshrl.u32 %v495, 7
        %v497 = vsub.s32 0, %v496
        %v498 = vrot.slane %v450, %v497
        %v499 = vlaneseq
        %v500 = vshrl.u32 %v499, 7
        %v501 = vsub.s32 4, %v500
        %v502 = vrot.slane %v450, %v501
        %v507 = vmul.f32 %v471, %v490
        %v508 = vmul.f32 %v472, %v494
        %v509 = vmul.f32 %v473, %v498
        %v510 = vmul.f32 %v474, %v502
        %v511 = vsub.f32 1.0, %v483
        %v512 = vsub.f32 1.0, %v484
        %v513 = vmul.f32 %v423, %v455
        %v514 = vmul.f32 %v430, %v456
        %v515 = vmul.f32 %v437, %v457
        %v516 = vmul.f32 %v444, %v458
        %v519 = vlaneseq
        %v520 = vshrl.u32 %v519, 7
        %v521 = vsub.s32 0, %v520
        %v522 = vrot.slane %v511, %v521
        %v523 = vlaneseq
        %v524 = vshrl.u32 %v523, 7
        %v525 = vsub.s32 4, %v524
        %v526 = vrot.slane %v511, %v525
        %v527 = vlaneseq
        %v528 = vshrl.u32 %v527, 7
        %v529 = vsub.s32 0, %v528
        %v530 = vrot.slane %v512, %v529
        %v531 = vlaneseq
        %v532 = vshrl.u32 %v531, 7
        %v533 = vsub.s32 4, %v532
        %v534 = vrot.slane %v512, %v533
        %vm539 = vcmask 1040384
        %v540 = vsel %vm539, %v507, %v522
        %v541 = vsel %vm539, %v508, %v526
        %v542 = vsel %vm539, %v509, %v530
        %v543 = vsel %vm539, %v510, %v534
        %vm544 = vcmask 1041408
        %v545 = vsel %vm544, %v540, %v490
        %v546 = vsel %vm544, %v541, %v494
        %v547 = vsel %vm544, %v542, %v498
        %v548 = vsel %vm544, %v543, %v502
        %vm549 = vcmask 1042432
        %v550 = vsel %vm549, %v545, %v513
        %v551 = vsel %vm549, %v546, %v514
        %v552 = vsel %vm549, %v547, %v515
        %v553 = vsel %vm549, %v548, %v516
        %v554 = vsel %vm287, %v550, %v423
        %v555 = vsel %vm287, %v551, %v430
        %v556 = vsel %vm287, %v552, %v437
        %v557 = vsel %vm287, %v553, %v444
        %vm558 = vcmask 1044480
        %v559 = vsel %vm558, %v554, 0.0
        %v560 = vsel %vm558, %v555, 0.0
        %v561 = vsel %vm558, %v556, 0.0
        %v562 = vsel %vm558, %v557, 0.0
        %p563 = scmp.eq.s32.totalorder %s25, 0
        // Predicated region
        $region37: #{tpu_custom_call.1} parent=31 // pred_check
          %p564 = pneg %p563
        $region38: #{tpu_custom_call.1} parent=31 // pred_check_branch
          %566 = sbr.rel (%p564) target = $region40
        $region39: #{tpu_custom_call.1} parent=31 // pred_region
          %567 = vst [vmem:[%s226] sm:$0xff] %v559
          %568 = vst [vmem:[%s226 + $0x8] sm:$0xff] %v560
          %569 = vst [vmem:[%s226 + $0x10] sm:$0xff] %v561
          %570 = vst [vmem:[%s226 + $0x18] sm:$0xff] %v562
        $region40: #{tpu_custom_call.1} parent=31 // pred_fallthru
          _
        %p571 = scmp.ne.s32.totalorder %s25, 0
        // Predicated region
        $region41: #{tpu_custom_call.1} parent=31 // pred_check
          %p572 = pneg %p571
        $region42: #{tpu_custom_call.1} parent=31 // pred_check_branch
          %574 = sbr.rel (%p572) target = $region44
        $region43: #{tpu_custom_call.1} parent=31 // pred_region
          %v575 = vld [vmem:[%s226] sm:$0xff]
          %v576 = vld [vmem:[%s226 + $0x8] sm:$0xff]
          %v577 = vld [vmem:[%s226 + $0x10] sm:$0xff]
          %v578 = vld [vmem:[%s226 + $0x18] sm:$0xff]
          %v579 = vadd.f32 %v575, %v559
          %v580 = vadd.f32 %v576, %v560
          %v581 = vadd.f32 %v577, %v561
          %v582 = vadd.f32 %v578, %v562
          %583 = vst [vmem:[%s226] sm:$0xff] %v579
          %584 = vst [vmem:[%s226 + $0x8] sm:$0xff] %v580
          %585 = vst [vmem:[%s226 + $0x10] sm:$0xff] %v581
          %586 = vst [vmem:[%s226 + $0x18] sm:$0xff] %v582
        $region44: #{tpu_custom_call.1} parent=31 // pred_fallthru
          _
        %s587 = sand.u32 %s117, 1
        %s588 = scalar_lea.sflag [#allocation4], %s587
        %s589 = sand.u32 %s117, 1
        %s590 = smul.addr %s589, 32
        %s591 = scalar_lea.vmem [#allocation5], %s590
        // Predicated region
        $region45: #{tpu_custom_call.1} parent=31 // pred_check
          %p592 = pneg %p127
        $region46: #{tpu_custom_call.1} parent=31 // pred_check_branch
          %594 = sbr.rel (%p592) target = $region48
        $region47: #{tpu_custom_call.1} parent=31 // pred_region
          %s596 = ssub.s32 512, 512
          %597 = vsyncadd %s588, %s596
          %s598 = smul.addr %s24, 4
          %s599 = smul.addr %s598, 128
          %s600 = scalar_lea.hbm %s3, %s599
          %s602 = sshll.u32 %s591, 4
          %s603 = int_to_ptr.vmem [resolvable:$true] %s602
          %605 = dma.vmem_to_hbm [thread:$0]  %s603, 512, %s600, %s588
        $region48: #{tpu_custom_call.1} parent=31 // pred_fallthru
          _
      $region32: #{tpu_custom_call.1} parent=5 // pred_fallthru
        _
      %p606 = scmp.le.s32.totalorder 2, %s15
      // Predicated region
      $region49: #{tpu_custom_call.1} parent=5 // pred_check
        %p607 = pneg %p606
      $region50: #{tpu_custom_call.1} parent=5 // pred_check_branch
        %609 = sbr.rel (%p607) target = $region52
      $region51: #{tpu_custom_call.1} parent=5 // pred_region
        %s610 = ssub.s32 %s15, 2
        // Predicated region
        $region53: #{tpu_custom_call.1} parent=51 // pred_check
          %p611 = pneg %p133
        $region54: #{tpu_custom_call.1} parent=51 // pred_check_branch
          %613 = sbr.rel (%p611) target = $region56
        $region55: #{tpu_custom_call.1} parent=51 // pred_region
          %s614 = sand.u32 %s118, 1
          %s615 = scalar_lea.sflag [#allocation4], %s614
          %s616 = sand.u32 %s118, 1
          %s617 = smul.addr %s616, 32
          %s618 = scalar_lea.vmem [#allocation5], %s617
          %619 = dma.done %s615, 512
        $region56: #{tpu_custom_call.1} parent=51 // pred_fallthru
          _
      $region52: #{tpu_custom_call.1} parent=5 // pred_fallthru
        _
    $region6: #{tpu_custom_call.1} parent=1 // loop_footer
      %s19 = sadd.s32 1, %s15
    $region7: #{tpu_custom_call.1} parent=1 // loop_footer_branch
      %14 = sbr.rel target = $region3
    $region8: #{tpu_custom_call.1} parent=1 // loop_exit
      _
    %620 = vsyncpa [#allocation3], 1
    %s621 = scalar_lea.sflag [#allocation3], 1
    %622 = vsyncpa %s621, 1
    %623 = vsyncpa [#allocation4], 1
    %s624 = scalar_lea.sflag [#allocation4], 1
    %625 = vsyncpa %s624, 1

</llo_original>
